<compile_context>
chip_gen: v7x
topology: tpu7x:2x2x1
jax: 0.10.0
libtpu: 0.0.40
codegen_flags: <defaults>
</compile_context>

<pallas_src>
import jax
import jax.numpy as jnp
from jax import lax
from jax.experimental import pallas as pl
from jax.experimental.pallas import tpu as pltpu


def _linear_sigmoid_kernel(x_ref, wt_ref, b_ref, o_ref):
    x = x_ref[...]                      # (B, IN)    f32
    wt = wt_ref[...]                    # (IN, OUT)  f32 -- pre-transposed parameter
    b = b_ref[...]                      # (1, OUT)   f32 -- row bias

    # x @ W^T expressed as a plain (row, col) contraction on the
    # pre-transposed weight: no in-kernel transpose/relayout possible.
    acc = lax.dot_general(
        x, wt,
        dimension_numbers=(((1,), (0,)), ((), ())),
        preferred_element_type=jnp.float32,
    )                                   # (B, OUT), f32 MXU accumulation

    acc = acc + b                       # sublane broadcast of the bias row
    o_ref[...] = jax.nn.sigmoid(acc).astype(o_ref.dtype)


def prepare_params(weight, bias):
    """One-time parameter prep (outside the hot path).

    weight: (OUT, IN) f32 in PyTorch convention -> returns (IN, OUT).
    bias:   (OUT,)    f32                       -> returns (1, OUT).
    """
    wt = jnp.asarray(weight).T          # paid once per parameter, not per call
    b2 = jnp.asarray(bias).reshape(1, -1)
    return wt, b2


def linear_sigmoid(x, wt, b2):
    """x: (..., IN) f32, wt: (IN, OUT) f32 (pre-transposed), b2: (1, OUT) f32."""
    orig_shape = x.shape
    IN = wt.shape[0]
    OUT = wt.shape[1]

    # Flatten any leading dims into sublane rows (mirrors nn.Linear semantics
    # and batches many tiny instances into a single pallas_call).
    x2 = x.reshape(-1, IN)
    B = x2.shape[0]

    vmem = pl.BlockSpec(memory_space=pltpu.MemorySpace.VMEM)  # full array, no pipeline

    out2 = pl.pallas_call(
        _linear_sigmoid_kernel,
        out_shape=jax.ShapeDtypeStruct((B, OUT), x.dtype),
        in_specs=[vmem, vmem, vmem],
        out_specs=vmem,
    )(x2, wt, b2)

    return out2.reshape(orig_shape[:-1] + (OUT,))


if __name__ == "__main__":
    key = jax.random.PRNGKey(0)
    k_x, k_w, k_b = jax.random.split(key, 3)

    B, IN, OUT = 8, 4, 4
    # Deterministic parameter init (mimics nn.Linear uniform(-1/sqrt(in), 1/sqrt(in))).
    bound = 1.0 / jnp.sqrt(jnp.float32(IN))
    weight = jax.random.uniform(k_w, (OUT, IN), jnp.float32, -bound, bound)
    bias = jax.random.uniform(k_b, (OUT,), jnp.float32, -bound, bound)
    x = jax.random.normal(k_x, (B, IN), jnp.float32)

    # One-time parameter preparation (hot path sees only the pallas_call).
    wt, b2 = prepare_params(weight, bias)

    out = linear_sigmoid(x, wt, b2)
    jax.block_until_ready(out)

    # Reference check in plain JAX (original PyTorch semantics).
    ref = jax.nn.sigmoid(x @ weight.T + bias)
    assert out.shape == (B, OUT), "shape mismatch vs reference"
    assert jnp.allclose(out, ref, atol=1e-5), "mismatch vs reference"

    print("KERNEL_OK")
</pallas_src>

<mosaic_0001>
module attributes {stable_mosaic.version = 11 : i64} {
  func.func @_linear_sigmoid_kernel(%arg0: memref<8x4xf32, #tpu.memory_space<vmem>>, %arg1: memref<4x4xf32, #tpu.memory_space<vmem>>, %arg2: memref<1x4xf32, #tpu.memory_space<vmem>>, %arg3: memref<8x4xf32, #tpu.memory_space<vmem>>) attributes {dimension_semantics = [], scalar_prefetch = 0 : i64, scratch_operands = 0 : i64, tpu.core_type = #tpu.core_type<tc>} {
    %c0 = arith.constant 0 : index
    %c0_0 = arith.constant 0 : index
    %0 = vector.load %arg0[%c0, %c0_0] : memref<8x4xf32, #tpu.memory_space<vmem>>, vector<8x4xf32>
    %c0_1 = arith.constant 0 : index
    %c0_2 = arith.constant 0 : index
    %1 = vector.load %arg1[%c0_1, %c0_2] : memref<4x4xf32, #tpu.memory_space<vmem>>, vector<4x4xf32>
    %c0_3 = arith.constant 0 : index
    %c0_4 = arith.constant 0 : index
    %2 = vector.load %arg2[%c0_3, %c0_4] : memref<1x4xf32, #tpu.memory_space<vmem>>, vector<1x4xf32>
    %cst = arith.constant dense<0.000000e+00> : vector<8x4xf32>
    %3 = tpu.matmul %0, %1, %cst {dimension_numbers = #tpu.dot_dimension_numbers<[1], [0], [0], [1], [0, 0, 1, 1], [], []>} : vector<8x4xf32>, vector<4x4xf32>, vector<8x4xf32> -> vector<8x4xf32>
    %4 = vector.broadcast %2 : vector<1x4xf32> to vector<8x4xf32>
    %5 = arith.addf %3, %4 : vector<8x4xf32>
    %6 = arith.negf %5 : vector<8x4xf32>
    %7 = math.exp %6 : vector<8x4xf32>
    %cst_5 = arith.constant 1.000000e+00 : f32
    %8 = vector.broadcast %cst_5 : f32 to vector<8x4xf32>
    %9 = arith.addf %8, %7 : vector<8x4xf32>
    %10 = arith.divf %8, %9 : vector<8x4xf32>
    %c0_6 = arith.constant 0 : index
    %c0_7 = arith.constant 0 : index
    %11 = vector.load %arg3[%c0_6, %c0_7] : memref<8x4xf32, #tpu.memory_space<vmem>>, vector<8x4xf32>
    tpu.vector_store %arg3[%c0_6, %c0_7], %10 {strides = array<i32>} : memref<8x4xf32, #tpu.memory_space<vmem>>, vector<8x4xf32>,
    return
  }
}

</mosaic_0001>

<llo_original>
// kernel: tpu_custom_call.1
$region0: #{tpu_custom_call.1}
  #allocation0 [shape = 'u32[]', space=smem, size = 0x4, offset = 0x4, fixed_abs, tag = 'smem constant byte address 0x4 - core index']
  #allocation1 [shape = 'u32[144,128]{1,0:T(1,128)}', space=vmem, size = 0x12000, scoped, tag = 'internal scratch']
  %s0 = inlined_call_operand.vmem [shape: f32[8,4], index: 0, kind: input, shape index: {}]
  %s1 = inlined_call_operand.vmem [shape: f32[4,4], index: 1, kind: input, shape index: {}]
  %s2 = inlined_call_operand.vmem [shape: f32[1,4], index: 2, kind: input, shape index: {}]
  %s3 = inlined_call_operand.vmem [shape: f32[8,4], index: 3, kind: output, shape index: {}]
  %s4 = sld [smem:[#allocation0]]
  $region22: #{tpu_custom_call.1} parent=0
    _
  %s6 = ssub.s32 1, %s4
  %s7 = scalar_select 0, %s6, %s4
  // Predicated region
  $region2: #{tpu_custom_call.1} parent=0 // pred_check
    _
  $region3: #{tpu_custom_call.1} parent=0 // pred_check_branch
    %9 = sbr.rel (0) target = $region5
  $region4: #{tpu_custom_call.1} parent=0 // pred_region
    _
  $region5: #{tpu_custom_call.1} parent=0 // pred_fallthru
    _
  // Predicated region
  $region6: #{tpu_custom_call.1} parent=0 // pred_check
    _
  $region7: #{tpu_custom_call.1} parent=0 // pred_check_branch
    %11 = sbr.rel (0) target = $region9
  $region8: #{tpu_custom_call.1} parent=0 // pred_region
    _
  $region9: #{tpu_custom_call.1} parent=0 // pred_fallthru
    _
  // Predicated region
  $region10: #{tpu_custom_call.1} parent=0 // pred_check
    _
  $region11: #{tpu_custom_call.1} parent=0 // pred_check_branch
    %13 = sbr.rel (0) target = $region13
  $region12: #{tpu_custom_call.1} parent=0 // pred_region
    _
  $region13: #{tpu_custom_call.1} parent=0 // pred_fallthru
    _
  %v14 = vld [vmem:[%s0] sm:$0xff]
  %v15 = vld [vmem:[%s1] sm:$0xf]
  %v16 = vld [vmem:[%s2] sm:$0x1]
  %v18 = vlaneseq
  %v19 = vshrl.u32 %v18, 7
  %v20 = vsub.s32 0, %v19
  %v21 = vrot.slane %v16, %v20
  %vm23 = vcmask 31744
  %v25 = vsel %vm23, %v14, 0
  %vm27 = vcmask 1043456
  %v29 = vsel %vm27, %v15, 0
  %31 = vmatprep.subr.mxu0 0.0
  %32 = vmatpush1.msra.mxu0 %v29
  %33 = vmatprep.subr.mxu0 0.0
  %34 = vmatpush1.msra.mxu0 0.0
  %35 = vmatprep.subr.mxu0 0.0
  %36 = vmatpush1.msra.mxu0 0.0
  %37 = vmatprep.subr.mxu0 0.0
  %38 = vmatpush1.msra.mxu0 0.0
  %39 = vmatprep.subr.mxu0 0.0
  %40 = vmatpush1.msra.mxu0 0.0
  %41 = vmatprep.subr.mxu0 0.0
  %42 = vmatpush1.msra.mxu0 0.0
  %43 = vmatprep.subr.mxu0 0.0
  %44 = vmatpush1.msra.mxu0 0.0
  %45 = vmatprep.subr.mxu0 0.0
  %46 = vmatpush1.msra.mxu0 0.0
  %47 = vmatprep.subr.mxu0 0.0
  %48 = vmatpush1.msra.mxu0 0.0
  %49 = vmatprep.subr.mxu0 0.0
  %50 = vmatpush1.msra.mxu0 0.0
  %51 = vmatprep.subr.mxu0 0.0
  %52 = vmatpush1.msra.mxu0 0.0
  %53 = vmatprep.subr.mxu0 0.0
  %54 = vmatpush1.msra.mxu0 0.0
  %55 = vmatprep.subr.mxu0 0.0
  %56 = vmatpush1.msra.mxu0 0.0
  %57 = vmatprep.subr.mxu0 0.0
  %58 = vmatpush1.msra.mxu0 0.0
  %59 = vmatprep.subr.mxu0 0.0
  %60 = vmatpush1.msra.mxu0 0.0
  %61 = vmatprep.subr.mxu0 0.0
  %62 = vmatpush1.msra.mxu0 0.0
  %63 = vmatprep.subr.mxu0 0.0
  %64 = vmatpush1.msra.mxu0 0.0
  %65 = vmatprep.subr.mxu0 0.0
  %66 = vmatpush1.msra.mxu0 0.0
  %67 = vmatprep.subr.mxu0 0.0
  %68 = vmatpush1.msra.mxu0 0.0
  %69 = vmatprep.subr.mxu0 0.0
  %70 = vmatpush1.msra.mxu0 0.0
  %71 = vmatprep.subr.mxu0 0.0
  %72 = vmatpush1.msra.mxu0 0.0
  %73 = vmatprep.subr.mxu0 0.0
  %74 = vmatpush1.msra.mxu0 0.0
  %75 = vmatprep.subr.mxu0 0.0
  %76 = vmatpush1.msra.mxu0 0.0
  %77 = vmatprep.subr.mxu0 0.0
  %78 = vmatpush1.msra.mxu0 0.0
  %79 = vmatprep.subr.mxu0 0.0
  %80 = vmatpush1.msra.mxu0 0.0
  %81 = vmatprep.subr.mxu0 0.0
  %82 = vmatpush1.msra.mxu0 0.0
  %83 = vmatprep.subr.mxu0 0.0
  %84 = vmatpush1.msra.mxu0 0.0
  %85 = vmatprep.subr.mxu0 0.0
  %86 = vmatpush1.msra.mxu0 0.0
  %87 = vmatprep.subr.mxu0 0.0
  %88 = vmatpush1.msra.mxu0 0.0
  %89 = vmatprep.subr.mxu0 0.0
  %90 = vmatpush1.msra.mxu0 0.0
  %91 = vmatprep.subr.mxu0 0.0
  %92 = vmatpush1.msra.mxu0 0.0
  %93 = vmatprep.subr.mxu0 0.0
  %94 = vmatpush1.msra.mxu0 0.0
  %95 = vmatprep.mubr.f32.mxu0 0.0
  %96 = vmatmul.mubr.f32.gmra.mrb[0].mxu0 %v25
  %v97 = vpop.f32.mrb[0].mxu0
  %v98 = vadd.f32 %v21, %v97
  %v99 = vpop.f32.mrb[0].mxu0
  %100 = vdwg.mxu0
  %v101 = vxor.u32 %v98, 2147483648
  %v102 = vmul.f32 %v101, 1.442695
  %v103 = vpow.pop %v102
  %v104 = vadd.f32 %v103, 1.0
  %v105 = vrcp.pop %v104
  %v106 = vmul.f32 1.0, %v105
  %107 = vst.msk [vmem:[%s3] sm:$0xff] %vm23, %v106
  // Predicated region
  $region14: #{tpu_custom_call.1} parent=0 // pred_check
    _
  $region15: #{tpu_custom_call.1} parent=0 // pred_check_branch
    %109 = sbr.rel (0) target = $region17
  $region16: #{tpu_custom_call.1} parent=0 // pred_region
    _
  $region17: #{tpu_custom_call.1} parent=0 // pred_fallthru
    _
  // Predicated region
  $region18: #{tpu_custom_call.1} parent=0 // pred_check
    _
  $region19: #{tpu_custom_call.1} parent=0 // pred_check_branch
    %111 = sbr.rel (0) target = $region21
  $region20: #{tpu_custom_call.1} parent=0 // pred_region
    _
  $region21: #{tpu_custom_call.1} parent=0 // pred_fallthru
    _

</llo_original>
